<compile_context>
chip_gen: v7x
topology: tpu7x:2x2x1
jax: 0.10.0
libtpu: 0.0.40
codegen_flags: <defaults>
</compile_context>

<pallas_src>
import jax
import jax.numpy as jnp
from jax.experimental import pallas as pl
from jax.experimental.pallas import tpu as pltpu


def _lstf_linear_kernel(x_ref, w_ref, b_ref, o_ref):
    # x_ref: (S, tile_N)  column slab of X = reshape(transpose(x), (S, B*F))
    # w_ref: (P, S)       full weight, resident in VMEM across the grid
    # b_ref: (P, 1)       f32 bias, resident
    # o_ref: (P, tile_N)  lane-dense output slab
    acc = jnp.dot(w_ref[...], x_ref[...],
                  preferred_element_type=jnp.float32)          # MXU, f32 accum
    o_ref[...] = (acc + b_ref[...]).astype(o_ref.dtype)        # fused epilogue


def _vmem_budget_bytes():
    """Generation-aware (vmem_limit_bytes, tile_budget_bytes)."""
    try:
        cap = getattr(pltpu.get_tpu_info(), "vmem_capacity_bytes", None)
    except Exception:
        cap = None
    if not cap:
        # Safe floor: v7x has the smallest physical VMEM (64 MiB per core).
        cap = 64 * 1024 * 1024
    # Request ~3/4 of physical VMEM (v7x: ~48 MiB, v5e/v6e: ~96 MiB), capped at
    # 100 MiB, and leave headroom for Mosaic-internal scratch when sizing tiles.
    vmem_limit = int(min((cap * 3) // 4, 100 * 1024 * 1024))
    tile_budget = vmem_limit - 4 * 1024 * 1024
    return vmem_limit, tile_budget


def _pick_tiling(n, s, p, x_item, w_item, out_item, tile_budget):
    """Choose (tile_n, n_pad): the largest lane-dense N tile whose
    double-buffered working set fits `tile_budget`, padded minimally (128-lane
    granularity plus < one tile for grid divisibility), with >= 2 grid steps
    whenever the problem is wide enough to split (v7x megacore)."""
    lanes = pl.cdiv(n, 128)                       # 128-lane column groups
    resident = 2 * p * s * w_item + 2 * p * 4     # W + bias (conservatively x2)

    def fits(cols):
        t = cols * 128
        return resident + 2 * s * t * x_item + 2 * p * t * out_item <= tile_budget

    cols = 1
    c = 2
    while c <= lanes and fits(c):
        cols = c
        c *= 2
    if fits(lanes):                               # whole problem in one tile
        cols = lanes

    num_tiles = pl.cdiv(lanes, cols)
    if num_tiles < 2 and lanes >= 2:              # let both v7x TCs participate
        num_tiles = 2
    cols = pl.cdiv(lanes, num_tiles)              # re-balance -> minimal padding
    num_tiles = pl.cdiv(lanes, cols)
    tile_n = cols * 128
    return tile_n, num_tiles * tile_n


def lstf_linear_matmul(x_sn, weight, bias, *, out_dtype=None):
    """Core kernel:  out(P, N) = weight(P, S) @ x_sn(S, N) + bias[:, None].

    Callers that can produce x in (S, N = B*F) layout and consume (P, N)
    directly (folding the module's transpose/permute into neighbouring ops)
    should use this entry point and skip the layout passes in
    lstf_linear_forward.
    """
    S, N = x_sn.shape
    P = weight.shape[0]
    out_dtype = jnp.dtype(out_dtype) if out_dtype is not None else x_sn.dtype

    x_item = jnp.dtype(x_sn.dtype).itemsize
    w_item = jnp.dtype(weight.dtype).itemsize
    out_item = out_dtype.itemsize

    vmem_limit, tile_budget = _vmem_budget_bytes()
    tile_n, n_pad = _pick_tiling(N, S, P, x_item, w_item, out_item, tile_budget)
    if n_pad != N:
        x_sn = jnp.pad(x_sn, ((0, 0), (0, n_pad - N)))

    bias2d = bias.reshape(P, 1).astype(jnp.float32)

    cost = pl.CostEstimate(
        flops=2 * P * S * n_pad,
        transcendentals=0,
        bytes_accessed=(S * n_pad * x_item + P * S * w_item + P * 4
                        + P * n_pad * out_item),
    )

    out2d = pl.pallas_call(
        _lstf_linear_kernel,
        out_shape=jax.ShapeDtypeStruct((P, n_pad), out_dtype),
        grid_spec=pltpu.PrefetchScalarGridSpec(
            num_scalar_prefetch=0,
            grid=(n_pad // tile_n,),
            in_specs=[
                pl.BlockSpec((S, tile_n), lambda nb: (0, nb)),  # X column slab
                pl.BlockSpec((P, S), lambda nb: (0, 0)),        # W, VMEM-resident
                pl.BlockSpec((P, 1), lambda nb: (0, 0)),        # bias, resident
            ],
            out_specs=pl.BlockSpec((P, tile_n), lambda nb: (0, nb)),
        ),
        compiler_params=pltpu.CompilerParams(
            dimension_semantics=("parallel",),   # N tiles shard across TCs (v7x)
            vmem_limit_bytes=vmem_limit,
        ),
        cost_estimate=cost,
    )(x_sn, weight, bias2d)

    return out2d[:, :N] if n_pad != N else out2d


def lstf_linear_forward(x, weight, bias, *, compute_dtype=None, out_dtype=None):
    """x: (B, S, F), weight: (P, S), bias: (P,) -> (B, P, F).

    compute_dtype (e.g. jnp.bfloat16): cast x/W before the matmul (f32 MXU
    accumulation either way).  out_dtype: result dtype (default: x's original
    dtype); pass bf16 together with a bf16 compute_dtype to also halve the
    store-side HBM traffic.
    """
    B, S, F = x.shape
    P = weight.shape[0]
    if out_dtype is None:
        out_dtype = x.dtype

    if compute_dtype is not None:
        x = x.astype(compute_dtype)             # cast BEFORE the layout pass:
        weight = weight.astype(compute_dtype)   # the transpose then moves half the bytes

    # Layout plumbing (one XLA pass each way).  If your producer/consumer can
    # work in (S, B*F) / (P, B*F) layouts, call lstf_linear_matmul directly and
    # fold these permutes away.
    x2d = jnp.transpose(x, (1, 0, 2)).reshape(S, B * F)
    out2d = lstf_linear_matmul(x2d, weight, bias, out_dtype=out_dtype)
    return out2d.reshape(P, B, F).transpose(1, 0, 2)


def lstf_linear_reference(x, weight, bias):
    # Pure-JAX reference matching the PyTorch forward exactly.
    y = jnp.einsum("bsf,ps->bfp", x, weight) + bias            # (B, F, P)
    return jnp.transpose(y, (0, 2, 1))                         # (B, P, F)


if __name__ == "__main__":
    # Small shapes consistent with the module: batch=2, seq_len=8, feature_num=4, pred_len=12
    B, seq_len, feature_num, pred_len = 2, 8, 4, 12

    key = jax.random.PRNGKey(0)
    kx, kw, kb = jax.random.split(key, 3)

    x = jax.random.normal(kx, (B, seq_len, feature_num), dtype=jnp.float32)

    # Deterministic parameter init (mimics nn.Linear's uniform(-1/sqrt(in), 1/sqrt(in)))
    bound = 1.0 / jnp.sqrt(jnp.float32(seq_len))
    weight = jax.random.uniform(kw, (pred_len, seq_len), minval=-bound, maxval=bound,
                                dtype=jnp.float32)
    bias = jax.random.uniform(kb, (pred_len,), minval=-bound, maxval=bound,
                              dtype=jnp.float32)

    # f32 path — exact match vs reference.
    out = jax.block_until_ready(lstf_linear_forward(x, weight, bias))
    ref = lstf_linear_reference(x, weight, bias)
    assert out.shape == (B, pred_len, feature_num), out.shape
    assert out.dtype == x.dtype
    assert jnp.allclose(out, ref, atol=1e-5, rtol=1e-5), "f32 mismatch vs reference"

    # bf16 compute + bf16 output (halves both read and write HBM traffic),
    # compared against a reference using the same bf16-rounded inputs.
    out_bf16 = jax.block_until_ready(
        lstf_linear_forward(x, weight, bias,
                            compute_dtype=jnp.bfloat16, out_dtype=jnp.bfloat16))
    ref_bf16 = lstf_linear_reference(
        x.astype(jnp.bfloat16).astype(jnp.float32),
        weight.astype(jnp.bfloat16).astype(jnp.float32),
        bias)
    assert out_bf16.shape == (B, pred_len, feature_num), out_bf16.shape
    assert out_bf16.dtype == jnp.bfloat16
    assert jnp.allclose(out_bf16.astype(jnp.float32), ref_bf16,
                        atol=3e-2, rtol=3e-2), "bf16 mismatch vs reference"

    # Core (S, N) -> (P, N) entry point (no wrapper layout passes) — same math.
    x2d = jnp.transpose(x, (1, 0, 2)).reshape(seq_len, B * feature_num)
    out2d = jax.block_until_ready(lstf_linear_matmul(x2d, weight, bias))
    ref2d = jnp.transpose(ref, (1, 0, 2)).reshape(pred_len, B * feature_num)
    assert jnp.allclose(out2d, ref2d, atol=1e-5, rtol=1e-5), "core mismatch vs reference"

    print("KERNEL_OK")
</pallas_src>

<mosaic_0001>
module attributes {stable_mosaic.version = 11 : i64} {
  func.func @_lstf_linear_kernel(%arg0: i32, %arg1: memref<8x128xf32, #tpu.memory_space<vmem>>, %arg2: memref<12x8xf32, #tpu.memory_space<vmem>>, %arg3: memref<12x1xf32, #tpu.memory_space<vmem>>, %arg4: memref<12x128xf32, #tpu.memory_space<vmem>>) attributes {dimension_semantics = [#tpu.dimension_semantics<parallel>], iteration_bounds = array<i64: 1>, scalar_prefetch = 0 : i64, scratch_operands = 0 : i64, tpu.core_type = #tpu.core_type<tc>, window_params = [{transform_indices = @transform_0, window_bounds = array<i64: 8, 128>}, {pipeline_mode = #tpu.pipeline_mode<synchronous>, transform_indices = @transform_1, window_bounds = array<i64: 12, 8>}, {pipeline_mode = #tpu.pipeline_mode<synchronous>, transform_indices = @transform_2, window_bounds = array<i64: 12, 1>}, {transform_indices = @transform_3, window_bounds = array<i64: 12, 128>}]} {
    %c0 = arith.constant 0 : index
    %c0_0 = arith.constant 0 : index
    %0 = vector.load %arg2[%c0, %c0_0] : memref<12x8xf32, #tpu.memory_space<vmem>>, vector<12x8xf32>
    %c0_1 = arith.constant 0 : index
    %c0_2 = arith.constant 0 : index
    %1 = vector.load %arg1[%c0_1, %c0_2] : memref<8x128xf32, #tpu.memory_space<vmem>>, vector<8x128xf32>
    %cst = arith.constant dense<0.000000e+00> : vector<12x128xf32>
    %2 = tpu.matmul %0, %1, %cst {dimension_numbers = #tpu.dot_dimension_numbers<[1], [0], [0], [1], [0, 0, 1, 1], [], []>} : vector<12x8xf32>, vector<8x128xf32>, vector<12x128xf32> -> vector<12x128xf32>
    %c0_3 = arith.constant 0 : index
    %c0_4 = arith.constant 0 : index
    %3 = vector.load %arg3[%c0_3, %c0_4] : memref<12x1xf32, #tpu.memory_space<vmem>>, vector<12x1xf32>
    %4 = vector.broadcast %3 : vector<12x1xf32> to vector<12x128xf32>
    %5 = arith.addf %2, %4 : vector<12x128xf32>
    %c0_5 = arith.constant 0 : index
    %c0_6 = arith.constant 0 : index
    %6 = vector.load %arg4[%c0_5, %c0_6] : memref<12x128xf32, #tpu.memory_space<vmem>>, vector<12x128xf32>
    tpu.vector_store %arg4[%c0_5, %c0_6], %5 {strides = array<i32>} : memref<12x128xf32, #tpu.memory_space<vmem>>, vector<12x128xf32>,
    return
  }
  func.func @transform_0(%arg0: i32) -> (i32, i32) {
    %c0_i32 = arith.constant 0 : i32
    %c0_i32_0 = arith.constant 0 : i32
    return %c0_i32, %arg0 : i32, i32
  }
  func.func @transform_1(%arg0: i32) -> (i32, i32) {
    %c0_i32 = arith.constant 0 : i32
    %c0_i32_0 = arith.constant 0 : i32
    %c0_i32_1 = arith.constant 0 : i32
    return %c0_i32, %c0_i32_0 : i32, i32
  }
  func.func @transform_2(%arg0: i32) -> (i32, i32) {
    %c0_i32 = arith.constant 0 : i32
    %c0_i32_0 = arith.constant 0 : i32
    %c0_i32_1 = arith.constant 0 : i32
    return %c0_i32, %c0_i32_0 : i32, i32
  }
  func.func @transform_3(%arg0: i32) -> (i32, i32) {
    %c0_i32 = arith.constant 0 : i32
    %c0_i32_0 = arith.constant 0 : i32
    return %c0_i32, %arg0 : i32, i32
  }
}

</mosaic_0001>

<llo_original>
// kernel: tpu_custom_call.1
$region0: #{tpu_custom_call.1}
  #allocation0 [shape = 'u32[]', space=smem, size = 0x4, offset = 0x4, fixed_abs, tag = 'smem constant byte address 0x4 - core index']
  #allocation1 [shape = 'u32[144,128]{1,0:T(1,128)}', space=vmem, size = 0x12000, scoped, tag = 'internal scratch']
  %s0 = inlined_call_operand.vmem [shape: f32[8,128], index: 0, kind: input, shape index: {}]
  %s1 = inlined_call_operand.vmem [shape: f32[12,8], index: 1, kind: input, shape index: {}]
  %s2 = inlined_call_operand.vmem [shape: f32[12,1], index: 2, kind: input, shape index: {}]
  %s3 = inlined_call_operand.hbm [shape: f32[12,128], index: 3, kind: output, shape index: {}]
  %s4 = sld [smem:[#allocation0]]
  $region22: #{tpu_custom_call.1} parent=0
    _
  %s6 = ssub.s32 1, %s4
  %s7 = scalar_select 0, %s6, %s4
  $region1: #{tpu_custom_call.1} parent=0
    #allocation2 [shape = 'u8[8192]{0}', space=vmem, size = 0x2000, scoped, tag = 'output window, operand 0, single buffered']
    #allocation3 [shape = 's32[1]{0}', space=sflag, size = 0x4, scoped, tag = 'scoped memory for tpu_custom_call.1']
    %8 = vsyncpa [#allocation3], 0
    // Predicated region
    $region2: #{tpu_custom_call.1} parent=1 // pred_check
      _
    $region3: #{tpu_custom_call.1} parent=1 // pred_check_branch
      %10 = sbr.rel (0) target = $region5
    $region4: #{tpu_custom_call.1} parent=1 // pred_region
      _
    $region5: #{tpu_custom_call.1} parent=1 // pred_fallthru
      _
    // Predicated region
    $region6: #{tpu_custom_call.1} parent=1 // pred_check
      _
    $region7: #{tpu_custom_call.1} parent=1 // pred_check_branch
      %12 = sbr.rel (0) target = $region9
    $region8: #{tpu_custom_call.1} parent=1 // pred_region
      _
    $region9: #{tpu_custom_call.1} parent=1 // pred_fallthru
      _
    // Predicated region
    $region10: #{tpu_custom_call.1} parent=1 // pred_check
      _
    $region11: #{tpu_custom_call.1} parent=1 // pred_check_branch
      %14 = sbr.rel (0) target = $region13
    $region12: #{tpu_custom_call.1} parent=1 // pred_region
      _
    $region13: #{tpu_custom_call.1} parent=1 // pred_fallthru
      _
    %v15 = vld [vmem:[%s1] sm:$0xff]
    %v16 = vld [vmem:[%s1 + $0x8] sm:$0xf]
    %v17 = vld [vmem:[%s0] sm:$0xff]
    %v18 = vld [vmem:[%s2] sm:$0xff]
    %v19 = vld [vmem:[%s2 + $0x8] sm:$0xf]
    %21 = vset.pattern.permute.xlu0 0
    %22 = vperm.xlu0 %21, %v18
    %v23 = vpop.permute.xlu0 %22
    %26 = vset.pattern.permute.xlu0 0
    %27 = vperm.xlu0 %26, %v19
    %v28 = vpop.permute.xlu0 %27
    %vm30 = vcmask 64512
    %v32 = vsel %vm30, %v15, 0
    %v35 = vsel %vm30, %v16, 0
    %37 = vmatprep.subr.mxu0 0.0
    %38 = vmatpush1.msra.mxu0 %v17
    %39 = vmatprep.subr.mxu0 0.0
    %40 = vmatpush1.msra.mxu0 0.0
    %41 = vmatprep.subr.mxu0 0.0
    %42 = vmatpush1.msra.mxu0 0.0
    %43 = vmatprep.subr.mxu0 0.0
    %44 = vmatpush1.msra.mxu0 0.0
    %45 = vmatprep.subr.mxu0 0.0
    %46 = vmatpush1.msra.mxu0 0.0
    %47 = vmatprep.subr.mxu0 0.0
    %48 = vmatpush1.msra.mxu0 0.0
    %49 = vmatprep.subr.mxu0 0.0
    %50 = vmatpush1.msra.mxu0 0.0
    %51 = vmatprep.subr.mxu0 0.0
    %52 = vmatpush1.msra.mxu0 0.0
    %53 = vmatprep.subr.mxu0 0.0
    %54 = vmatpush1.msra.mxu0 0.0
    %55 = vmatprep.subr.mxu0 0.0
    %56 = vmatpush1.msra.mxu0 0.0
    %57 = vmatprep.subr.mxu0 0.0
    %58 = vmatpush1.msra.mxu0 0.0
    %59 = vmatprep.subr.mxu0 0.0
    %60 = vmatpush1.msra.mxu0 0.0
    %61 = vmatprep.subr.mxu0 0.0
    %62 = vmatpush1.msra.mxu0 0.0
    %63 = vmatprep.subr.mxu0 0.0
    %64 = vmatpush1.msra.mxu0 0.0
    %65 = vmatprep.subr.mxu0 0.0
    %66 = vmatpush1.msra.mxu0 0.0
    %67 = vmatprep.subr.mxu0 0.0
    %68 = vmatpush1.msra.mxu0 0.0
    %69 = vmatprep.subr.mxu0 0.0
    %70 = vmatpush1.msra.mxu0 0.0
    %71 = vmatprep.subr.mxu0 0.0
    %72 = vmatpush1.msra.mxu0 0.0
    %73 = vmatprep.subr.mxu0 0.0
    %74 = vmatpush1.msra.mxu0 0.0
    %75 = vmatprep.subr.mxu0 0.0
    %76 = vmatpush1.msra.mxu0 0.0
    %77 = vmatprep.subr.mxu0 0.0
    %78 = vmatpush1.msra.mxu0 0.0
    %79 = vmatprep.subr.mxu0 0.0
    %80 = vmatpush1.msra.mxu0 0.0
    %81 = vmatprep.subr.mxu0 0.0
    %82 = vmatpush1.msra.mxu0 0.0
    %83 = vmatprep.subr.mxu0 0.0
    %84 = vmatpush1.msra.mxu0 0.0
    %85 = vmatprep.subr.mxu0 0.0
    %86 = vmatpush1.msra.mxu0 0.0
    %87 = vmatprep.subr.mxu0 0.0
    %88 = vmatpush1.msra.mxu0 0.0
    %89 = vmatprep.subr.mxu0 0.0
    %90 = vmatpush1.msra.mxu0 0.0
    %91 = vmatprep.subr.mxu0 0.0
    %92 = vmatpush1.msra.mxu0 0.0
    %93 = vmatprep.subr.mxu0 0.0
    %94 = vmatpush1.msra.mxu0 0.0
    %95 = vmatprep.subr.mxu0 0.0
    %96 = vmatpush1.msra.mxu0 0.0
    %97 = vmatprep.subr.mxu0 0.0
    %98 = vmatpush1.msra.mxu0 0.0
    %99 = vmatprep.subr.mxu0 0.0
    %100 = vmatpush1.msra.mxu0 0.0
    %101 = vmatprep.mubr.f32.mxu0 0.0
    %102 = vmatmul.mubr.f32.gmra.mrb[0].mxu0 %v32
    %v103 = vpop.f32.mrb[0].mxu0
    %v104 = vadd.f32 %v23, %v103
    %v105 = vpop.f32.mrb[0].mxu0
    %106 = vmatprep.mubr.f32.mxu0 0.0
    %107 = vmatmul.mubr.f32.gmra.mrb[0].mxu0 %v35
    %v108 = vpop.f32.mrb[0].mxu0
    %v109 = vadd.f32 %v28, %v108
    %v110 = vpop.f32.mrb[0].mxu0
    %111 = vdwg.mxu0
    %112 = vst [vmem:[#allocation2] sm:$0xff] %v104
    %113 = vst [vmem:[#allocation2 + $0x8] sm:$0xf] %v109
    // Predicated region
    $region14: #{tpu_custom_call.1} parent=1 // pred_check
      _
    $region15: #{tpu_custom_call.1} parent=1 // pred_check_branch
      %115 = sbr.rel (0) target = $region17
    $region16: #{tpu_custom_call.1} parent=1 // pred_region
      %s117 = ssub.s32 256, 256
      %118 = vsyncadd [#allocation3], %s117
      %s119 = sshll.u32 [#allocation2], 4
      %s120 = int_to_ptr.vmem [resolvable:$true] %s119
      %125 = dma.vmem_to_hbm [thread:$0]  %s120, 256, %s3, [#allocation3], 128, 128, 8
    $region17: #{tpu_custom_call.1} parent=1 // pred_fallthru
      _
    // Predicated region
    $region18: #{tpu_custom_call.1} parent=1 // pred_check
      _
    $region19: #{tpu_custom_call.1} parent=1 // pred_check_branch
      %127 = sbr.rel (0) target = $region21
    $region20: #{tpu_custom_call.1} parent=1 // pred_region
      %128 = dma.done [#allocation3], 256
    $region21: #{tpu_custom_call.1} parent=1 // pred_fallthru
      _
    %129 = vsyncpa [#allocation3], 1

</llo_original>
